<compile_context>
chip_gen: v7x
topology: tpu7x:2x2x1
jax: 0.10.0
libtpu: 0.0.40
codegen_flags: <defaults>
</compile_context>

<pallas_src>
import jax
import jax.numpy as jnp
from jax.experimental import pallas as pl
from jax.experimental.pallas import tpu as pltpu

ALPHA = 1.0
GAMMA = 2.0
_MIB = 1024 * 1024


def _focal_ce_partial_kernel(logits_ref, targets_ref, partial_ref, acc_ref):
    # logits_ref : (1, C, T) native dtype  (classes on sublanes, pixels lane-dense)
    # targets_ref: (1, 1, T) int32         (-1 marks padded pixels)
    # partial_ref: (1, 1, 1) f32           per-(batch, chunk) CE sum, written on last tile
    # acc_ref    : (1, T)    f32           lane-wide running CE sum, persists across tiles
    t = pl.program_id(2)

    @pl.when(t == 0)
    def _init():
        acc_ref[...] = jnp.zeros_like(acc_ref)

    # Whole-block math: one load + one cast, full-width VPU/EUP ops, class
    # reductions on the (otherwise idle) XLU sublane axis.
    x = logits_ref[0].astype(jnp.float32)                       # (C, T)
    tgt = targets_ref[0]                                        # (1, T) int32
    C, T = x.shape

    row_max = jnp.max(x, axis=0, keepdims=True)                 # (1, T)  XLU
    e = jnp.exp(x - row_max)                                    # (C, T)  EUP
    sum_exp = jnp.sum(e, axis=0, keepdims=True)                 # (1, T)  XLU
    cls_ids = jax.lax.broadcasted_iota(jnp.int32, (C, T), 0)
    tgt_logit = jnp.sum(jnp.where(tgt == cls_ids, x, 0.0),
                        axis=0, keepdims=True)                  # (1, T)  XLU

    # Per-pixel cross entropy; mask pad pixels (tgt < 0) so they contribute 0.
    ce = (jnp.log(sum_exp) + row_max) - tgt_logit               # (1, T)
    ce = jnp.where(tgt >= 0, ce, 0.0)

    # Lane-wide accumulation: a single full-width VALU add per tile.
    acc_ref[...] = acc_ref[...] + ce

    @pl.when(t == pl.num_programs(2) - 1)
    def _finalize():
        tile_sum = jnp.sum(acc_ref[...], axis=-1, keepdims=True)   # (1, 1), once per chunk
        partial_ref[...] = tile_sum.reshape(partial_ref.shape)


def _padded_rows(n, dtype):
    """Second-minor dim rounds up to 8 * (4 // itemsize) sublanes in VMEM."""
    packing = max(1, 4 // jnp.dtype(dtype).itemsize)
    mult = 8 * packing
    return ((n + mult - 1) // mult) * mult


def _tile_footprint_bytes(tile_p, c, in_dtype):
    """Estimated VMEM bytes per grid step: double-buffered input blocks
    (sublane-padded) + f32 whole-block intermediates + the acc scratch."""
    in_item = jnp.dtype(in_dtype).itemsize
    c_in = _padded_rows(c, in_dtype)
    c_f32 = _padded_rows(c, jnp.float32)
    logits_buf = c_in * tile_p * in_item
    targets_buf = 8 * tile_p * 4
    blocks = 2 * (logits_buf + targets_buf)                 # 2-deep pipelining
    # f32 (C, T) temporaries (x, x - max, e) + ~6 lane-wide (1, T) rows + acc.
    interm = 3 * c_f32 * tile_p * 4 + 7 * 8 * tile_p * 4
    return blocks + interm


def _choose_pixel_tile(hw, c, in_dtype, budget_bytes=24 * _MIB):
    """Largest multiple-of-128 tile dividing hw whose *padded* per-step VMEM
    footprint (double buffers + f32 intermediates) fits the budget."""
    assert hw % 128 == 0
    best = 128
    t = 128
    while t <= hw:
        if hw % t == 0 and _tile_footprint_bytes(t, c, in_dtype) <= budget_bytes:
            best = t
        t += 128
    return best


def _choose_chunks(n_batch, n_tiles):
    """Split pixel tiles into parallel chunks so both v7x TensorCores get work
    when the batch axis alone provides < 2 parallel items."""
    if n_batch >= 2 or n_tiles < 2:
        return 1
    for cand in (2, 4, 3):
        if n_tiles % cand == 0:
            return cand
    return 1


def focal_loss(inputs_nchw, targets_nhw, alpha=ALPHA, gamma=GAMMA, tile_p=None):
    """inputs_nchw: (N, C, H, W) logits (any float dtype);
    targets_nhw: (N, H, W) integer class ids in [0, C)."""
    N, C, H, W = inputs_nchw.shape
    HW = H * W
    P = N * HW                                  # true pixel count (mean divisor)

    # Free views (no HBM transpose / no host upcast): classes on sublanes,
    # pixels lane-dense on the last axis.
    logits = inputs_nchw.reshape(N, C, HW)
    targets = targets_nhw.reshape(N, 1, HW).astype(jnp.int32)

    # Guarded non-128-aligned fallback: pad the pixel axis; pad targets = -1
    # are masked inside the kernel and excluded from the divisor P.
    if HW % 128 != 0:
        pad = 128 - HW % 128
        logits = jnp.pad(logits, ((0, 0), (0, 0), (0, pad)))
        targets = jnp.pad(targets, ((0, 0), (0, 0), (0, pad)), constant_values=-1)
    HW_p = logits.shape[-1]

    if tile_p is None:
        tile_p = _choose_pixel_tile(HW_p, C, logits.dtype)
    assert HW_p % tile_p == 0 and tile_p % 128 == 0, "pixel tile must be 128-aligned and divide H*W (padded)"

    n_tiles = HW_p // tile_p
    n_chunks = _choose_chunks(N, n_tiles)
    tiles_per_chunk = n_tiles // n_chunks

    footprint = _tile_footprint_bytes(tile_p, C, logits.dtype)
    vmem_limit = int(min(48 * _MIB, max(32 * _MIB, 2 * footprint)))

    in_item = jnp.dtype(logits.dtype).itemsize
    cost = pl.CostEstimate(
        flops=int(6 * N * HW_p * C),
        transcendentals=int(N * HW_p * (C + 1)),
        bytes_accessed=int(N * C * HW_p * in_item + N * HW_p * 4 + N * n_chunks * 4),
    )

    partials = pl.pallas_call(
        _focal_ce_partial_kernel,
        out_shape=jax.ShapeDtypeStruct((N, n_chunks, 1), jnp.float32),
        grid_spec=pltpu.PrefetchScalarGridSpec(
            num_scalar_prefetch=0,
            grid=(N, n_chunks, tiles_per_chunk),
            in_specs=[
                pl.BlockSpec((1, C, tile_p),
                             lambda n, c, t, _tpc=tiles_per_chunk: (n, 0, c * _tpc + t)),
                pl.BlockSpec((1, 1, tile_p),
                             lambda n, c, t, _tpc=tiles_per_chunk: (n, 0, c * _tpc + t)),
            ],
            out_specs=pl.BlockSpec((1, 1, 1), lambda n, c, t: (n, c, 0)),
            scratch_shapes=[pltpu.VMEM((1, tile_p), jnp.float32)],
        ),
        compiler_params=pltpu.CompilerParams(
            dimension_semantics=("parallel", "parallel", "arbitrary"),
            vmem_limit_bytes=vmem_limit,
        ),
        cost_estimate=cost,
    )(logits, targets)

    # CrossEntropyLoss 'mean' over all real pixels, then focal scaling.
    ce_mean = jnp.sum(partials) / jnp.float32(P)
    pt = jnp.exp(-ce_mean)
    one_minus_pt = 1.0 - pt
    if gamma == 2.0:
        focal_scale = one_minus_pt * one_minus_pt      # multiply chain, no pow
    else:
        focal_scale = one_minus_pt ** gamma
    return (alpha * focal_scale * ce_mean).astype(jnp.float32)


def focal_loss_ref(inputs_nchw, targets_nhw, alpha=ALPHA, gamma=GAMMA):
    """Pure-JAX reference mirroring torch.nn.CrossEntropyLoss + focal scaling."""
    N, C, H, W = inputs_nchw.shape
    logits = jnp.transpose(inputs_nchw, (0, 2, 3, 1)).reshape(-1, C).astype(jnp.float32)
    tgt = targets_nhw.reshape(-1).astype(jnp.int32)
    logp = jax.nn.log_softmax(logits, axis=-1)
    ce = -jnp.mean(jnp.take_along_axis(logp, tgt[:, None], axis=-1))
    pt = jnp.exp(-ce)
    return alpha * (1.0 - pt) ** gamma * ce


if __name__ == "__main__":
    key = jax.random.PRNGKey(0)
    k1, k2 = jax.random.split(key)
    N, C, H, W = 2, 4, 16, 16
    inputs = jax.random.normal(k1, (N, C, H, W), dtype=jnp.float32)
    targets = jax.random.randint(k2, (N, H, W), 0, C, dtype=jnp.int32)

    # tile_p=128 -> grid (2, 1, 2): exercises the running-sum accumulation path
    # across pixel tiles as well as the parallel batch axis at this toy shape.
    loss = jax.block_until_ready(focal_loss(inputs, targets, tile_p=128))
    ref = jax.block_until_ready(focal_loss_ref(inputs, targets))

    assert jnp.allclose(loss, ref, rtol=1e-5, atol=1e-6), (loss, ref)
    print("KERNEL_OK")
</pallas_src>

<mosaic_0001>
module attributes {stable_mosaic.version = 11 : i64} {
  func.func @_focal_ce_partial_kernel(%arg0: i32, %arg1: i32, %arg2: i32, %arg3: memref<1x4x128xf32, #tpu.memory_space<vmem>>, %arg4: memref<1x1x128xi32, #tpu.memory_space<vmem>>, %arg5: memref<1x1x1xf32, #tpu.memory_space<vmem>>, %arg6: memref<1x128xf32, #tpu.memory_space<vmem>>) attributes {dimension_semantics = [#tpu.dimension_semantics<parallel>, #tpu.dimension_semantics<parallel>, #tpu.dimension_semantics<arbitrary>], iteration_bounds = array<i64: 2, 1, 2>, scalar_prefetch = 0 : i64, scratch_operands = 1 : i64, tpu.core_type = #tpu.core_type<tc>, window_params = [{transform_indices = @transform_0, window_bounds = array<i64: 1, 4, 128>}, {transform_indices = @transform_1, window_bounds = array<i64: 1, 1, 128>}, {transform_indices = @transform_2, window_bounds = array<i64: 1, 1, 1>}]} {
    %c0_i32 = arith.constant 0 : i32
    %0 = arith.cmpi eq, %arg2, %c0_i32 : i32
    %1 = arith.extui %0 : i1 to i32
    %c0_i32_0 = arith.constant 0 : i32
    %2 = arith.cmpi ne, %1, %c0_i32_0 : i32
    scf.if %2 {
      %cst_16 = arith.constant 0.000000e+00 : f32
      %34 = vector.broadcast %cst_16 : f32 to vector<1x128xf32>
      %c0_17 = arith.constant 0 : index
      %c0_18 = arith.constant 0 : index
      %35 = vector.load %arg6[%c0_17, %c0_18] : memref<1x128xf32, #tpu.memory_space<vmem>>, vector<1x128xf32>
      tpu.vector_store %arg6[%c0_17, %c0_18], %34 {strides = array<i32>} : memref<1x128xf32, #tpu.memory_space<vmem>>, vector<1x128xf32>,
    } else {
    }
    %c0 = arith.constant 0 : index
    %c0_1 = arith.constant 0 : index
    %c0_2 = arith.constant 0 : index
    %3 = vector.load %arg3[%c0, %c0_1, %c0_2] : memref<1x4x128xf32, #tpu.memory_space<vmem>>, vector<1x4x128xf32>
    %4 = vector.shape_cast %3 : vector<1x4x128xf32> to vector<4x128xf32>
    %c0_3 = arith.constant 0 : index
    %c0_4 = arith.constant 0 : index
    %c0_5 = arith.constant 0 : index
    %5 = vector.load %arg4[%c0_3, %c0_4, %c0_5] : memref<1x1x128xi32, #tpu.memory_space<vmem>>, vector<1x1x128xi32>
    %6 = vector.shape_cast %5 : vector<1x1x128xi32> to vector<1x128xi32>
    %cst = arith.constant dense<0xFF800000> : vector<128xf32>
    %7 = vector.multi_reduction <maximumf>, %4, %cst [0] : vector<4x128xf32> to vector<128xf32>
    %8 = vector.shape_cast %7 : vector<128xf32> to vector<1x128xf32>
    %9 = vector.broadcast %8 : vector<1x128xf32> to vector<4x128xf32>
    %10 = arith.subf %4, %9 : vector<4x128xf32>
    %11 = math.exp %10 : vector<4x128xf32>
    %cst_6 = arith.constant dense<0.000000e+00> : vector<128xf32>
    %12 = vector.multi_reduction <add>, %11, %cst_6 [0] : vector<4x128xf32> to vector<128xf32>
    %13 = vector.shape_cast %12 : vector<128xf32> to vector<1x128xf32>
    %14 = tpu.iota {dimensions = array<i32: 0>} : vector<4x128xi32>
    %15 = vector.broadcast %6 : vector<1x128xi32> to vector<4x128xi32>
    %16 = arith.cmpi eq, %15, %14 : vector<4x128xi32>
    %cst_7 = arith.constant 0.000000e+00 : f32
    %17 = vector.broadcast %cst_7 : f32 to vector<4x128xf32>
    %18 = arith.select %16, %4, %17 : vector<4x128xi1>, vector<4x128xf32>
    %cst_8 = arith.constant dense<0.000000e+00> : vector<128xf32>
    %19 = vector.multi_reduction <add>, %18, %cst_8 [0] : vector<4x128xf32> to vector<128xf32>
    %20 = vector.shape_cast %19 : vector<128xf32> to vector<1x128xf32>
    %21 = math.log %13 : vector<1x128xf32>
    %22 = arith.addf %21, %8 : vector<1x128xf32>
    %23 = arith.subf %22, %20 : vector<1x128xf32>
    %c0_i32_9 = arith.constant 0 : i32
    %24 = vector.broadcast %c0_i32_9 : i32 to vector<1x128xi32>
    %25 = arith.cmpi sge, %6, %24 : vector<1x128xi32>
    %cst_10 = arith.constant 0.000000e+00 : f32
    %26 = vector.broadcast %cst_10 : f32 to vector<1x128xf32>
    %27 = arith.select %25, %23, %26 : vector<1x128xi1>, vector<1x128xf32>
    %c0_11 = arith.constant 0 : index
    %c0_12 = arith.constant 0 : index
    %28 = vector.load %arg6[%c0_11, %c0_12] : memref<1x128xf32, #tpu.memory_space<vmem>>, vector<1x128xf32>
    %29 = arith.addf %28, %27 : vector<1x128xf32>
    %c0_13 = arith.constant 0 : index
    %c0_14 = arith.constant 0 : index
    %30 = vector.load %arg6[%c0_13, %c0_14] : memref<1x128xf32, #tpu.memory_space<vmem>>, vector<1x128xf32>
    tpu.vector_store %arg6[%c0_13, %c0_14], %29 {strides = array<i32>} : memref<1x128xf32, #tpu.memory_space<vmem>>, vector<1x128xf32>,
    %c1_i32 = arith.constant 1 : i32
    %31 = arith.cmpi eq, %arg2, %c1_i32 : i32
    %32 = arith.extui %31 : i1 to i32
    %c0_i32_15 = arith.constant 0 : i32
    %33 = arith.cmpi ne, %32, %c0_i32_15 : i32
    scf.if %33 {
      %c0_16 = arith.constant 0 : index
      %c0_17 = arith.constant 0 : index
      %34 = vector.load %arg6[%c0_16, %c0_17] : memref<1x128xf32, #tpu.memory_space<vmem>>, vector<1x128xf32>
      %cst_18 = arith.constant dense<0.000000e+00> : vector<1xf32>
      %35 = vector.multi_reduction <add>, %34, %cst_18 [1] : vector<1x128xf32> to vector<1xf32>
      %36 = vector.shape_cast %35 : vector<1xf32> to vector<1x1xf32>
      %37 = vector.shape_cast %36 : vector<1x1xf32> to vector<1x1x1xf32>
      %c0_19 = arith.constant 0 : index
      %c0_20 = arith.constant 0 : index
      %c0_21 = arith.constant 0 : index
      %38 = vector.load %arg5[%c0_19, %c0_20, %c0_21] : memref<1x1x1xf32, #tpu.memory_space<vmem>>, vector<1x1x1xf32>
      tpu.vector_store %arg5[%c0_19, %c0_20, %c0_21], %37 {strides = array<i32>} : memref<1x1x1xf32, #tpu.memory_space<vmem>>, vector<1x1x1xf32>,
    } else {
    }
    return
  }
  func.func @transform_0(%arg0: i32, %arg1: i32, %arg2: i32) -> (i32, i32, i32) {
    %c2_i32 = arith.constant 2 : i32
    %0 = arith.muli %arg1, %c2_i32 : i32
    %1 = arith.addi %0, %arg2 : i32
    %c0_i32 = arith.constant 0 : i32
    %c0_i32_0 = arith.constant 0 : i32
    return %arg0, %c0_i32, %1 : i32, i32, i32
  }
  func.func @transform_1(%arg0: i32, %arg1: i32, %arg2: i32) -> (i32, i32, i32) {
    %c2_i32 = arith.constant 2 : i32
    %0 = arith.muli %arg1, %c2_i32 : i32
    %1 = arith.addi %0, %arg2 : i32
    %c0_i32 = arith.constant 0 : i32
    %c0_i32_0 = arith.constant 0 : i32
    return %arg0, %c0_i32, %1 : i32, i32, i32
  }
  func.func @transform_2(%arg0: i32, %arg1: i32, %arg2: i32) -> (i32, i32, i32) {
    %c0_i32 = arith.constant 0 : i32
    %c0_i32_0 = arith.constant 0 : i32
    return %arg0, %arg1, %c0_i32 : i32, i32, i32
  }
}

</mosaic_0001>

<llo_original>
// kernel: tpu_custom_call.1
$region0: #{tpu_custom_call.1}
  #allocation0 [shape = 'u32[]', space=smem, size = 0x4, offset = 0x4, fixed_abs, tag = 'smem constant byte address 0x4 - core index']
  #allocation1 [shape = 'u32[144,128]{1,0:T(1,128)}', space=vmem, size = 0x12000, scoped, tag = 'internal scratch']
  #allocation2 [shape = 'f32[1,128]{1,0:T(1,128)}', space=vmem, size = 0x200, scoped, tag = 'scratch operand']
  %s0 = inlined_call_operand.hbm [shape: f32[2,4,256], index: 0, kind: input, shape index: {}]
  %s1 = inlined_call_operand.hbm [shape: s32[2,1,256], index: 1, kind: input, shape index: {}]
  %s2 = inlined_call_operand.vmem [shape: f32[2,1,1], index: 2, kind: output, shape index: {}]
  %s3 = sld [smem:[#allocation0]]
  $region57: #{tpu_custom_call.1} parent=0
    _
  %s5 = ssub.s32 1, %s3
  %s6 = scalar_select 0, %s5, %s3
  $region1: #{tpu_custom_call.1} parent=0
    #allocation3 [shape = 'u8[4096]{0}', space=vmem, size = 0x1000, scoped, tag = 'input window, operand 0']
    #allocation4 [shape = 's32[2]{0}', space=sflag, size = 0x8, scoped, tag = 'scoped memory for tpu_custom_call.1']
    #allocation5 [shape = 'u8[1024]{0}', space=vmem, size = 0x400, scoped, tag = 'input window, operand 1']
    #allocation6 [shape = 's32[2]{0}', space=sflag, size = 0x8, scoped, tag = 'scoped memory for tpu_custom_call.1']
    %7 = vsyncpa [#allocation4], 0
    %s8 = scalar_lea.sflag [#allocation4], 1
    %9 = vsyncpa %s8, 0
    %10 = vsyncpa [#allocation6], 0
    %s11 = scalar_lea.sflag [#allocation6], 1
    %12 = vsyncpa %s11, 0
    loop: start=0, step=1, limit=6
    $region2: #{tpu_custom_call.1} parent=1 // loop_pre_header
      _
    $region3: #{tpu_custom_call.1} parent=1 // loop_header
      %s14 = sphi 0, %s18
      %p15 = scmp.ge.s32.totalorder %s14, 6
      %s21 = sphi 0, %s40
      %s22 = sphi 0, %s36
      %s23 = sphi 0, %s32
      %s24 = sphi 0, %s21
      %s25 = sphi 0, %s22
      %s26 = sphi 0, %s23
      %s27 = sphi 0, %s24
      %s28 = sphi 0, %s25
      %s29 = sphi 0, %s26
      %s49 = sphi 0, %s51
      %s52 = sphi 0, %s49
      %s53 = sphi 0, %s52
      %s69 = sphi 0, %s53
      %s81 = sphi 0, %s83
      %s84 = sphi 0, %s81
      %s85 = sphi 0, %s84
      %s101 = sphi 0, %s85
      %s109 = sphi 0, %s111
      %s112 = sphi 0, %s109
      %s113 = sphi 0, %s112
      %s129 = sphi 0, %s113
    $region4: #{tpu_custom_call.1} parent=1 // loop_header_branch
      %17 = sbr.rel (%p15) target = $region8
    $region5: #{tpu_custom_call.1} parent=1 // loop_body
      %s19 = ssub.s32 %s14, 1
      %s20 = ssub.s32 %s14, 2
      %s30 = sadd.s32 1, %s23
      %p31 = scmp.ge.s32.totalorder %s30, 2
      %s32 = scalar_select %p31, 0, %s30
      %s33 = sadd.s32 1, %s22
      %s34 = scalar_select %p31, %s33, %s22
      %p35 = scmp.ge.s32.totalorder %s34, 1
      %s36 = scalar_select %p35, 0, %s34
      %s37 = sadd.s32 1, %s21
      %s38 = scalar_select %p35, %s37, %s21
      %p39 = scmp.ge.s32.totalorder %s38, 2
      %s40 = scalar_select %p39, 0, %s38
      %s41 = smul.u32 %s22, 2
      %s42 = sadd.s32 %s41, %s23
      %s43 = smul.u32 %s36, 2
      %s44 = sadd.s32 %s43, %s32
      %s45 = ssub.s32 %s21, %s40
      %s46 = ssub.s32 %s42, %s44
      %s47 = sor.u32 %s45, %s46
      %p48 = scmp.eq.s32.totalorder %s47, 0
      %s50 = sadd.s32 %s49, 1
      %s51 = scalar_select %p48, %s49, %s50
      %p54 = pneg %p48
      %p55 = scmp.eq.s32.totalorder %s14, 3
      %p56 = por %p54, %p55
      %p57 = scmp.ne.s32.totalorder %s49, %s52
      %p58 = scmp.eq.s32.totalorder %s14, 0
      %p59 = por %p57, %p58
      %p60 = scmp.ne.s32.totalorder %s49, %s52
      %p61 = scmp.eq.s32.totalorder %s19, 3
      %p62 = por %p60, %p61
      %p63 = scmp.ne.s32.totalorder %s52, %s53
      %p64 = scmp.eq.s32.totalorder %s19, 0
      %p65 = por %p63, %p64
      %p66 = scmp.ne.s32.totalorder %s52, %s53
      %p67 = scmp.eq.s32.totalorder %s20, 3
      %p68 = por %p66, %p67
      %p70 = scmp.ne.s32.totalorder %s53, %s69
      %p71 = scmp.eq.s32.totalorder %s20, 0
      %p72 = por %p70, %p71
      %s73 = smul.u32 %s22, 2
      %s74 = sadd.s32 %s73, %s23
      %s75 = smul.u32 %s36, 2
      %s76 = sadd.s32 %s75, %s32
      %s77 = ssub.s32 %s21, %s40
      %s78 = ssub.s32 %s74, %s76
      %s79 = sor.u32 %s77, %s78
      %p80 = scmp.eq.s32.totalorder %s79, 0
      %s82 = sadd.s32 %s81, 1
      %s83 = scalar_select %p80, %s81, %s82
      %p86 = pneg %p80
      %p87 = scmp.eq.s32.totalorder %s14, 3
      %p88 = por %p86, %p87
      %p89 = scmp.ne.s32.totalorder %s81, %s84
      %p90 = scmp.eq.s32.totalorder %s14, 0
      %p91 = por %p89, %p90
      %p92 = scmp.ne.s32.totalorder %s81, %s84
      %p93 = scmp.eq.s32.totalorder %s19, 3
      %p94 = por %p92, %p93
      %p95 = scmp.ne.s32.totalorder %s84, %s85
      %p96 = scmp.eq.s32.totalorder %s19, 0
      %p97 = por %p95, %p96
      %p98 = scmp.ne.s32.totalorder %s84, %s85
      %p99 = scmp.eq.s32.totalorder %s20, 3
      %p100 = por %p98, %p99
      %p102 = scmp.ne.s32.totalorder %s85, %s101
      %p103 = scmp.eq.s32.totalorder %s20, 0
      %p104 = por %p102, %p103
      %s105 = ssub.s32 %s21, %s40
      %s106 = ssub.s32 %s22, %s36
      %s107 = sor.u32 %s105, %s106
      %p108 = scmp.eq.s32.totalorder %s107, 0
      %s110 = sadd.s32 %s109, 1
      %s111 = scalar_select %p108, %s109, %s110
      %p114 = pneg %p108
      %p115 = scmp.eq.s32.totalorder %s14, 3
      %p116 = por %p114, %p115
      %p117 = scmp.ne.s32.totalorder %s109, %s112
      %p118 = scmp.eq.s32.totalorder %s14, 0
      %p119 = por %p117, %p118
      %p120 = scmp.ne.s32.totalorder %s109, %s112
      %p121 = scmp.eq.s32.totalorder %s19, 3
      %p122 = por %p120, %p121
      %p123 = scmp.ne.s32.totalorder %s112, %s113
      %p124 = scmp.eq.s32.totalorder %s19, 0
      %p125 = por %p123, %p124
      %p126 = scmp.ne.s32.totalorder %s112, %s113
      %p127 = scmp.eq.s32.totalorder %s20, 3
      %p128 = por %p126, %p127
      %p130 = scmp.ne.s32.totalorder %s113, %s129
      %p131 = scmp.eq.s32.totalorder %s20, 0
      %p132 = por %p130, %p131
      %p133 = scmp.le.s32.totalorder 1, %s14
      %p134 = scmp.lt.s32.totalorder %s14, 5
      %p135 = pnand %p133, %p134
      %p136 = pneg %p135
      // Predicated region
      $region9: #{tpu_custom_call.1} parent=5 // pred_check
        _
      $region10: #{tpu_custom_call.1} parent=5 // pred_check_branch
        %138 = sbr.rel (%p135) target = $region12
      $region11: #{tpu_custom_call.1} parent=5 // pred_region
        %s139 = ssub.s32 %s14, 1
      $region12: #{tpu_custom_call.1} parent=5 // pred_fallthru
        _
      %p140 = scmp.lt.s32.totalorder %s14, 4
      // Predicated region
      $region13: #{tpu_custom_call.1} parent=5 // pred_check
        %p141 = pneg %p140
      $region14: #{tpu_custom_call.1} parent=5 // pred_check_branch
        %143 = sbr.rel (%p141) target = $region16
      $region15: #{tpu_custom_call.1} parent=5 // pred_region
        // Predicated region
        $region17: #{tpu_custom_call.1} parent=15 // pred_check
          %p144 = pneg %p59
        $region18: #{tpu_custom_call.1} parent=15 // pred_check_branch
          %146 = sbr.rel (%p144) target = $region20
        $region19: #{tpu_custom_call.1} parent=15 // pred_region
          %s147 = sand.u32 %s49, 1
          %s148 = scalar_lea.sflag [#allocation4], %s147
          %s149 = sand.u32 %s49, 1
          %s150 = smul.addr %s149, 4
          %s151 = scalar_lea.vmem [#allocation3], %s150
          %s152 = smul.u32 %s22, 2
          %s153 = sadd.s32 %s152, %s23
          %s155 = ssub.s32 64, 64
          %156 = vsyncadd %s148, %s155
          %s157 = smul.addr %s21, 2
          %s158 = sadd.s32 %s153, %s157
          %s159 = smul.addr %s158, 64
          %s160 = scalar_lea.hbm %s0, %s159
          %s162 = sshll.u32 %s151, 4
          %s163 = int_to_ptr.vmem [resolvable:$true] %s162
          %165 = dma.hbm_to_vmem [thread:$0]  %s160, 64, %s163, %s148
        $region20: #{tpu_custom_call.1} parent=15 // pred_fallthru
          _
        // Predicated region
        $region21: #{tpu_custom_call.1} parent=15 // pred_check
          %p166 = pneg %p91
        $region22: #{tpu_custom_call.1} parent=15 // pred_check_branch
          %168 = sbr.rel (%p166) target = $region24
        $region23: #{tpu_custom_call.1} parent=15 // pred_region
          %s169 = sand.u32 %s81, 1
          %s170 = scalar_lea.sflag [#allocation6], %s169
          %s171 = sand.u32 %s81, 1
          %s172 = scalar_lea.vmem [#allocation5], %s171
          %s173 = smul.u32 %s22, 2
          %s174 = sadd.s32 %s173, %s23
          %s176 = ssub.s32 16, 16
          %177 = vsyncadd %s170, %s176
          %s178 = smul.addr %s21, 2
          %s179 = sadd.s32 %s174, %s178
          %s180 = smul.addr %s179, 16
          %s181 = scalar_lea.hbm %s1, %s180
          %s183 = sshll.u32 %s172, 4
          %s184 = int_to_ptr.vmem [resolvable:$true] %s183
          %186 = dma.hbm_to_vmem [thread:$0]  %s181, 16, %s184, %s170
        $region24: #{tpu_custom_call.1} parent=15 // pred_fallthru
          _
      $region16: #{tpu_custom_call.1} parent=5 // pred_fallthru
        _
      %p187 = scmp.le.s32.totalorder 1, %s14
      %p188 = scmp.lt.s32.totalorder %s14, 5
      %p189 = pnand %p187, %p188
      %p190 = pneg %p189
      // Predicated region
      $region25: #{tpu_custom_call.1} parent=5 // pred_check
        _
      $region26: #{tpu_custom_call.1} parent=5 // pred_check_branch
        %192 = sbr.rel (%p189) target = $region28
      $region27: #{tpu_custom_call.1} parent=5 // pred_region
        %s193 = ssub.s32 %s14, 1
        %s194 = sand.u32 %s52, 1
        %s195 = scalar_lea.sflag [#allocation4], %s194
        %s196 = sand.u32 %s52, 1
        %s197 = smul.addr %s196, 4
        %s198 = scalar_lea.vmem [#allocation3], %s197
        // Predicated region
        $region29: #{tpu_custom_call.1} parent=27 // pred_check
          %p199 = pneg %p65
        $region30: #{tpu_custom_call.1} parent=27 // pred_check_branch
          %201 = sbr.rel (%p199) target = $region32
        $region31: #{tpu_custom_call.1} parent=27 // pred_region
          %202 = dma.done %s195, 64
        $region32: #{tpu_custom_call.1} parent=27 // pred_fallthru
          _
        %s203 = sand.u32 %s84, 1
        %s204 = scalar_lea.sflag [#allocation6], %s203
        %s205 = sand.u32 %s84, 1
        %s206 = scalar_lea.vmem [#allocation5], %s205
        // Predicated region
        $region33: #{tpu_custom_call.1} parent=27 // pred_check
          %p207 = pneg %p97
        $region34: #{tpu_custom_call.1} parent=27 // pred_check_branch
          %209 = sbr.rel (%p207) target = $region36
        $region35: #{tpu_custom_call.1} parent=27 // pred_region
          %210 = dma.done %s204, 16
        $region36: #{tpu_custom_call.1} parent=27 // pred_fallthru
          _
        %s211 = sand.u32 %s52, 1
        %s212 = scalar_lea.sflag [#allocation4], %s211
        %s213 = sand.u32 %s52, 1
        %s214 = smul.addr %s213, 4
        %s215 = scalar_lea.vmem [#allocation3], %s214
        %p216 = pneg %p65
        %p217 = pneg %p62
        %s218 = sand.u32 %s84, 1
        %s219 = scalar_lea.sflag [#allocation6], %s218
        %s220 = sand.u32 %s84, 1
        %s221 = scalar_lea.vmem [#allocation5], %s220
        %p222 = pneg %p97
        %p223 = pneg %p94
        %p224 = pneg %p125
        %p225 = pneg %p122
        %p226 = scmp.lt.s32.totalorder %s24, 1
        %s227 = scalar_select %p226, %s24, 1
        %p228 = scmp.lt.s32.totalorder %s25, 0
        %s229 = scalar_select %p228, %s25, 0
        %s230 = sadd.s32 %s229, %s227
        %s231 = scalar_lea.vmem %s2, %s230
        %s232 = smul.u32 %s25, 2
        %s233 = sadd.s32 %s232, %s26
        %s234 = smul.u32 %s25, 2
        %s235 = sadd.s32 %s234, %s26
        %p236 = scmp.lt.s32.totalorder %s24, 1
        %s237 = scalar_select %p236, %s24, 1
        %p238 = scmp.lt.s32.totalorder %s25, 0
        %s239 = scalar_select %p238, %s25, 0
        %s240 = sadd.s32 %s239, %s237
        %s241 = scalar_lea.vmem %s2, %s240
        %p242 = scmp.eq.s32.totalorder %s26, 0
        // Predicated region
        $region37: #{tpu_custom_call.1} parent=27 // pred_check
          %p243 = pneg %p242
        $region38: #{tpu_custom_call.1} parent=27 // pred_check_branch
          %245 = sbr.rel (%p243) target = $region40
        $region39: #{tpu_custom_call.1} parent=27 // pred_region
          %246 = vst [vmem:[#allocation2] sm:$0x1] 0.0
        $region40: #{tpu_custom_call.1} parent=27 // pred_fallthru
          _
        %v247 = vld [vmem:[%s198] sm:$0xf]
        %v248 = vld [vmem:[%s206] sm:$0x1]
        %vm249 = vcmask 1043456
        %v250 = vsel %vm249, %v247, -inf
        %v251 = vrot.slane %v250, 4
        %v252 = vmax.f32 %v250, %v251
        %v253 = vrot.slane %v252, 2
        %v254 = vmax.f32 %v252, %v253
        %v255 = vrot.slane %v254, 1
        %v256 = vmax.f32 %v254, %v255
        %v257 = vsub.f32 %v247, %v256
        %v258 = vmul.f32 %v257, 1.442695
        %v259 = vpow.pop %v258
        %v260 = vsel %vm249, %v259, 0.0
        %v261 = vrot.slane %v260, 4
        %v262 = vadd.f32 %v260, %v261
        %v263 = vrot.slane %v262, 2
        %v264 = vadd.f32 %v262, %v263
        %v265 = vrot.slane %v264, 1
        %v266 = vadd.f32 %v264, %v265
        %v267 = vlaneseq
        %v268 = vshrl.u32 %v267, 7
        %v269 = vlaneseq
        %v270 = vshrl.u32 %v269, 7
        %v271 = vsub.s32 0, %v270
        %v272 = vrot.slane %v248, %v271
        %vm273 = vcmp.eq.s32.totalorder %v272, %v268
        %v274 = vsel %vm273, %v247, 0.0
        %v275 = vsel %vm249, %v274, 0.0
        %v276 = vrot.slane %v275, 4
        %v277 = vadd.f32 %v275, %v276
        %v278 = vrot.slane %v277, 2
        %v279 = vadd.f32 %v277, %v278
        %v280 = vrot.slane %v279, 1
        %v281 = vadd.f32 %v279, %v280
        %v282 = vlog2.pop %v266
        %v283 = vmul.f32 %v282, 0.6931472
        %v284 = vadd.f32 %v283, %v256
        %v285 = vsub.f32 %v284, %v281
        %vm286 = vcmp.ge.s32.totalorder %v248, 0
        %v287 = vsel %vm286, %v285, 0.0
        %v288 = vld [vmem:[#allocation2] sm:$0x1]
        %v289 = vadd.f32 %v288, %v287
        %290 = vst [vmem:[#allocation2] sm:$0x1] %v289
        %p291 = scmp.eq.s32.totalorder %s26, 1
        // Predicated region
        $region41: #{tpu_custom_call.1} parent=27 // pred_check
          %p292 = pneg %p291
        $region42: #{tpu_custom_call.1} parent=27 // pred_check_branch
          %294 = sbr.rel (%p292) target = $region44
        $region43: #{tpu_custom_call.1} parent=27 // pred_region
          %v295 = vld [vmem:[#allocation2] sm:$0x1]
          %vm296 = vcmask 1040384
          %v297 = vsel %vm296, %v295, 0.0
          %298 = vadd.xlane.f32.xlu0 %v297
          %v299 = vpop.xlane.xlu0 %298
          %vm300 = vcmask 0
          %301 = vst.msk [vmem:[%s241] sm:$0x1] %vm300, %v299
        $region44: #{tpu_custom_call.1} parent=27 // pred_fallthru
          _
        %p302 = scmp.lt.s32.totalorder %s24, 1
        %s303 = scalar_select %p302, %s24, 1
        %p304 = scmp.lt.s32.totalorder %s25, 0
        %s305 = scalar_select %p304, %s25, 0
        %s306 = sadd.s32 %s305, %s303
        %s307 = scalar_lea.vmem %s2, %s306
        // Predicated region
        $region45: #{tpu_custom_call.1} parent=27 // pred_check
          %p308 = pneg %p122
        $region46: #{tpu_custom_call.1} parent=27 // pred_check_branch
          %310 = sbr.rel (%p308) target = $region48
        $region47: #{tpu_custom_call.1} parent=27 // pred_region
          _
        $region48: #{tpu_custom_call.1} parent=27 // pred_fallthru
          _
      $region28: #{tpu_custom_call.1} parent=5 // pred_fallthru
        _
      %p311 = scmp.le.s32.totalorder 2, %s14
      // Predicated region
      $region49: #{tpu_custom_call.1} parent=5 // pred_check
        %p312 = pneg %p311
      $region50: #{tpu_custom_call.1} parent=5 // pred_check_branch
        %314 = sbr.rel (%p312) target = $region52
      $region51: #{tpu_custom_call.1} parent=5 // pred_region
        %s315 = ssub.s32 %s14, 2
        // Predicated region
        $region53: #{tpu_custom_call.1} parent=51 // pred_check
          %p316 = pneg %p128
        $region54: #{tpu_custom_call.1} parent=51 // pred_check_branch
          %318 = sbr.rel (%p316) target = $region56
        $region55: #{tpu_custom_call.1} parent=51 // pred_region
          %p319 = scmp.lt.s32.totalorder %s27, 1
          %s320 = scalar_select %p319, %s27, 1
          %p321 = scmp.lt.s32.totalorder %s28, 0
          %s322 = scalar_select %p321, %s28, 0
          %s323 = sadd.s32 %s322, %s320
          %s324 = scalar_lea.vmem %s2, %s323
        $region56: #{tpu_custom_call.1} parent=51 // pred_fallthru
          _
      $region52: #{tpu_custom_call.1} parent=5 // pred_fallthru
        _
    $region6: #{tpu_custom_call.1} parent=1 // loop_footer
      %s18 = sadd.s32 1, %s14
    $region7: #{tpu_custom_call.1} parent=1 // loop_footer_branch
      %13 = sbr.rel target = $region3
    $region8: #{tpu_custom_call.1} parent=1 // loop_exit
      _
    %325 = vsyncpa [#allocation4], 1
    %s326 = scalar_lea.sflag [#allocation4], 1
    %327 = vsyncpa %s326, 1
    %328 = vsyncpa [#allocation6], 1
    %s329 = scalar_lea.sflag [#allocation6], 1
    %330 = vsyncpa %s329, 1

</llo_original>
